<compile_context>
chip_gen: v7x
topology: tpu7x:2x2x1
jax: 0.10.0
libtpu: 0.0.40
codegen_flags: <defaults>
</compile_context>

<pallas_src>
import functools

import jax
import jax.numpy as jnp
from jax.experimental import pallas as pl
from jax.experimental.pallas import tpu as pltpu

SIZES = [225, 200, 170, 140, 128]
LEAKY_SLOPE = 0.05


def _round_up(n, m):
    return ((n + m - 1) // m) * m


def _leaky(v):
    # 0 < slope < 1  =>  max(v, slope*v) == LeakyReLU(v)
    return jnp.maximum(v, LEAKY_SLOPE * v)


def mlp_kernel(x_ref, w1_ref, b1_ref, w2_ref, b2_ref, w3_ref, b3_ref,
               w4_ref, b4_ref, o_ref):
    cd = w1_ref.dtype  # matmul-input dtype (f32 or bf16); accumulate in f32

    # Layer 1: Lin1 + (Dropout = identity in eval) + LeakyReLU
    # x_ref already streams in `cd`, so the astype is a no-op when use_bf16=True.
    h = jnp.dot(x_ref[...].astype(cd), w1_ref[...],
                preferred_element_type=jnp.float32)
    h = _leaky(h + b1_ref[...])
    # Layer 2: Lin2 + (Dropout = identity in eval) + LeakyReLU
    h = jnp.dot(h.astype(cd), w2_ref[...], preferred_element_type=jnp.float32)
    h = _leaky(h + b2_ref[...])
    # Layer 3: Lin3 + LeakyReLU
    h = jnp.dot(h.astype(cd), w3_ref[...], preferred_element_type=jnp.float32)
    h = _leaky(h + b3_ref[...])
    # Layer 4: Lin4 (no activation)
    y = jnp.dot(h.astype(cd), w4_ref[...],
                preferred_element_type=jnp.float32) + b4_ref[...]
    o_ref[...] = y.astype(o_ref.dtype)


@functools.partial(jax.jit,
                   static_argnames=("block_b", "use_bf16", "out_dtype"))
def tl_faces_00_forward(x, params, *, block_b=1024, use_bf16=True,
                        out_dtype=jnp.float32):
    """x: (B, 225).  params: w{i} of shape (in,out), b{i} of shape (1,out)."""
    B, F = x.shape
    assert F == SIZES[0], f"expected feature dim {SIZES[0]}, got {F}"

    # Stream dtype for x / matmul inputs.
    cd = jnp.bfloat16 if use_bf16 else jnp.float32
    x = x.astype(cd)

    # Batch tile: multiple of 8 sublanes, no larger than (padded) B.
    tm = max(8, min(_round_up(block_b, 8), _round_up(B, 8)))
    Bp = _round_up(B, tm)
    if Bp != B:
        x = jnp.pad(x, ((0, Bp - B), (0, 0)))

    weights = []
    for i in range(4):
        weights.append(params[f"w{i+1}"].astype(cd))
        weights.append(params[f"b{i+1}"].astype(jnp.float32))

    grid = (Bp // tm,)

    # x / out tiles move through the pipeline; weights/biases are full blocks
    # with a constant index_map so they stay resident in VMEM across steps.
    x_spec = pl.BlockSpec((tm, SIZES[0]), lambda i: (i, 0))

    def resident_spec(a):
        return pl.BlockSpec(a.shape, lambda i: tuple(0 for _ in a.shape))

    in_specs = [x_spec] + [resident_spec(a) for a in weights]
    out_spec = pl.BlockSpec((tm, SIZES[-1]), lambda i: (i, 0))

    out_itemsize = jnp.dtype(out_dtype).itemsize
    flops = 2 * Bp * sum(SIZES[k] * SIZES[k + 1] for k in range(4))
    w_bytes = sum(int(a.size) * a.dtype.itemsize for a in weights)
    bytes_accessed = (Bp * SIZES[0] * jnp.dtype(cd).itemsize
                      + Bp * SIZES[-1] * out_itemsize
                      + w_bytes)
    cost = pl.CostEstimate(flops=flops, transcendentals=0,
                           bytes_accessed=bytes_accessed)

    out = pl.pallas_call(
        mlp_kernel,
        out_shape=jax.ShapeDtypeStruct((Bp, SIZES[-1]), out_dtype),
        grid=grid,
        in_specs=in_specs,
        out_specs=out_spec,
        compiler_params=pltpu.CompilerParams(
            dimension_semantics=("parallel",),
            # Explicit headroom for larger batch tiles (v5e default scoped VMEM
            # is only 16 MiB); 32 MiB is safe on v5e/v6e/v7x.
            vmem_limit_bytes=32 * 1024 * 1024),
        cost_estimate=cost,
    )(x, *weights)

    if Bp != B:
        out = out[:B]
    return out


def init_params(key):
    """Matches Layer_06.reset_parameters: weight ~ U(-lim, lim) with
    lim = 1/sqrt(weight.size()[0]).  PyTorch nn.Linear stores weight as
    (out_features, in_features), so size()[0] == out_features; bias = 0."""
    params = {}
    for i in range(4):
        fin, fout = SIZES[i], SIZES[i + 1]
        key, sub = jax.random.split(key)
        lim = 1.0 / jnp.sqrt(jnp.float32(fout))
        params[f"w{i+1}"] = jax.random.uniform(
            sub, (fin, fout), dtype=jnp.float32, minval=-lim, maxval=lim)
        params[f"b{i+1}"] = jnp.zeros((1, fout), dtype=jnp.float32)
    return params


def reference_forward(x, params):
    h = x.astype(jnp.float32)
    for i in range(4):
        h = h @ params[f"w{i+1}"] + params[f"b{i+1}"]
        if i < 3:
            h = jnp.maximum(h, LEAKY_SLOPE * h)
    return h


if __name__ == "__main__":
    key = jax.random.PRNGKey(0)
    params = init_params(key)

    # f32 path: tight tolerance.  Non-multiple-of-8 batch exercises padding.
    for B in (8, 6):
        key, xkey = jax.random.split(key)
        x = jax.random.normal(xkey, (B, SIZES[0]), dtype=jnp.float32)

        out = jax.block_until_ready(
            tl_faces_00_forward(x, params, use_bf16=False))
        ref = reference_forward(x, params)
        assert out.shape == (B, SIZES[-1])
        assert out.dtype == jnp.float32
        assert jnp.allclose(out, ref, atol=1e-4, rtol=1e-4), (
            f"f32 mismatch at B={B}: max err {jnp.max(jnp.abs(out - ref))}")

    # bf16 path (default): looser tolerance.  block_b=16 on B=40 exercises a
    # multi-step grid plus batch padding.
    for B, blk in ((8, 1024), (6, 1024), (40, 16)):
        key, xkey = jax.random.split(key)
        x = jax.random.normal(xkey, (B, SIZES[0]), dtype=jnp.float32)

        out = jax.block_until_ready(
            tl_faces_00_forward(x, params, block_b=blk))  # use_bf16=True default
        ref = reference_forward(x, params)
        assert out.shape == (B, SIZES[-1])
        err = jnp.max(jnp.abs(out - ref))
        assert jnp.allclose(out, ref, atol=5e-2, rtol=5e-2), (
            f"bf16 mismatch at B={B}: max err {err}")

    # bf16-output path (for fully bf16 downstream consumers).
    key, xkey = jax.random.split(key)
    x = jax.random.normal(xkey, (8, SIZES[0]), dtype=jnp.float32)
    out_bf = jax.block_until_ready(
        tl_faces_00_forward(x, params, out_dtype=jnp.bfloat16))
    ref = reference_forward(x, params)
    assert out_bf.dtype == jnp.bfloat16
    assert jnp.allclose(out_bf.astype(jnp.float32), ref, atol=6e-2, rtol=6e-2), (
        f"bf16-out mismatch: max err "
        f"{jnp.max(jnp.abs(out_bf.astype(jnp.float32) - ref))}")

    # TODO(synk): Dropout(p=0.1) is a no-op in eval mode; training-mode dropout
    # masking is not implemented in the kernel.
    print("KERNEL_OK")
</pallas_src>

<mosaic_0001>
module attributes {stable_mosaic.version = 11 : i64} {
  func.func @mlp_kernel(%arg0: i32, %arg1: memref<8x225xf32, #tpu.memory_space<vmem>>, %arg2: memref<225x200xf32, #tpu.memory_space<vmem>>, %arg3: memref<1x200xf32, #tpu.memory_space<vmem>>, %arg4: memref<200x170xf32, #tpu.memory_space<vmem>>, %arg5: memref<1x170xf32, #tpu.memory_space<vmem>>, %arg6: memref<170x140xf32, #tpu.memory_space<vmem>>, %arg7: memref<1x140xf32, #tpu.memory_space<vmem>>, %arg8: memref<140x128xf32, #tpu.memory_space<vmem>>, %arg9: memref<1x128xf32, #tpu.memory_space<vmem>>, %arg10: memref<8x128xf32, #tpu.memory_space<vmem>>) attributes {dimension_semantics = [#tpu.dimension_semantics<parallel>], iteration_bounds = array<i64: 1>, scalar_prefetch = 0 : i64, scratch_operands = 0 : i64, tpu.core_type = #tpu.core_type<tc>, window_params = [{transform_indices = @transform_0, window_bounds = array<i64: 8, 225>}, {pipeline_mode = #tpu.pipeline_mode<synchronous>, transform_indices = @transform_1, window_bounds = array<i64: 225, 200>}, {pipeline_mode = #tpu.pipeline_mode<synchronous>, transform_indices = @transform_2, window_bounds = array<i64: 1, 200>}, {pipeline_mode = #tpu.pipeline_mode<synchronous>, transform_indices = @transform_3, window_bounds = array<i64: 200, 170>}, {pipeline_mode = #tpu.pipeline_mode<synchronous>, transform_indices = @transform_4, window_bounds = array<i64: 1, 170>}, {pipeline_mode = #tpu.pipeline_mode<synchronous>, transform_indices = @transform_5, window_bounds = array<i64: 170, 140>}, {pipeline_mode = #tpu.pipeline_mode<synchronous>, transform_indices = @transform_6, window_bounds = array<i64: 1, 140>}, {pipeline_mode = #tpu.pipeline_mode<synchronous>, transform_indices = @transform_7, window_bounds = array<i64: 140, 128>}, {pipeline_mode = #tpu.pipeline_mode<synchronous>, transform_indices = @transform_8, window_bounds = array<i64: 1, 128>}, {transform_indices = @transform_9, window_bounds = array<i64: 8, 128>}]} {
    %c0 = arith.constant 0 : index
    %c0_0 = arith.constant 0 : index
    %0 = vector.load %arg1[%c0, %c0_0] : memref<8x225xf32, #tpu.memory_space<vmem>>, vector<8x225xf32>
    %c0_1 = arith.constant 0 : index
    %c0_2 = arith.constant 0 : index
    %1 = vector.load %arg2[%c0_1, %c0_2] : memref<225x200xf32, #tpu.memory_space<vmem>>, vector<225x200xf32>
    %cst = arith.constant dense<0.000000e+00> : vector<8x200xf32>
    %2 = tpu.matmul %0, %1, %cst {dimension_numbers = #tpu.dot_dimension_numbers<[1], [0], [0], [1], [0, 0, 1, 1], [], []>} : vector<8x225xf32>, vector<225x200xf32>, vector<8x200xf32> -> vector<8x200xf32>
    %c0_3 = arith.constant 0 : index
    %c0_4 = arith.constant 0 : index
    %3 = vector.load %arg3[%c0_3, %c0_4] : memref<1x200xf32, #tpu.memory_space<vmem>>, vector<1x200xf32>
    %4 = vector.broadcast %3 : vector<1x200xf32> to vector<8x200xf32>
    %5 = arith.addf %2, %4 : vector<8x200xf32>
    %cst_5 = arith.constant 5.000000e-02 : f32
    %6 = vector.broadcast %cst_5 : f32 to vector<8x200xf32>
    %7 = arith.mulf %6, %5 : vector<8x200xf32>
    %8 = arith.maximumf %5, %7 : vector<8x200xf32>
    %c0_6 = arith.constant 0 : index
    %c0_7 = arith.constant 0 : index
    %9 = vector.load %arg4[%c0_6, %c0_7] : memref<200x170xf32, #tpu.memory_space<vmem>>, vector<200x170xf32>
    %cst_8 = arith.constant dense<0.000000e+00> : vector<8x170xf32>
    %10 = tpu.matmul %8, %9, %cst_8 {dimension_numbers = #tpu.dot_dimension_numbers<[1], [0], [0], [1], [0, 0, 1, 1], [], []>} : vector<8x200xf32>, vector<200x170xf32>, vector<8x170xf32> -> vector<8x170xf32>
    %c0_9 = arith.constant 0 : index
    %c0_10 = arith.constant 0 : index
    %11 = vector.load %arg5[%c0_9, %c0_10] : memref<1x170xf32, #tpu.memory_space<vmem>>, vector<1x170xf32>
    %12 = vector.broadcast %11 : vector<1x170xf32> to vector<8x170xf32>
    %13 = arith.addf %10, %12 : vector<8x170xf32>
    %cst_11 = arith.constant 5.000000e-02 : f32
    %14 = vector.broadcast %cst_11 : f32 to vector<8x170xf32>
    %15 = arith.mulf %14, %13 : vector<8x170xf32>
    %16 = arith.maximumf %13, %15 : vector<8x170xf32>
    %c0_12 = arith.constant 0 : index
    %c0_13 = arith.constant 0 : index
    %17 = vector.load %arg6[%c0_12, %c0_13] : memref<170x140xf32, #tpu.memory_space<vmem>>, vector<170x140xf32>
    %cst_14 = arith.constant dense<0.000000e+00> : vector<8x140xf32>
    %18 = tpu.matmul %16, %17, %cst_14 {dimension_numbers = #tpu.dot_dimension_numbers<[1], [0], [0], [1], [0, 0, 1, 1], [], []>} : vector<8x170xf32>, vector<170x140xf32>, vector<8x140xf32> -> vector<8x140xf32>
    %c0_15 = arith.constant 0 : index
    %c0_16 = arith.constant 0 : index
    %19 = vector.load %arg7[%c0_15, %c0_16] : memref<1x140xf32, #tpu.memory_space<vmem>>, vector<1x140xf32>
    %20 = vector.broadcast %19 : vector<1x140xf32> to vector<8x140xf32>
    %21 = arith.addf %18, %20 : vector<8x140xf32>
    %cst_17 = arith.constant 5.000000e-02 : f32
    %22 = vector.broadcast %cst_17 : f32 to vector<8x140xf32>
    %23 = arith.mulf %22, %21 : vector<8x140xf32>
    %24 = arith.maximumf %21, %23 : vector<8x140xf32>
    %c0_18 = arith.constant 0 : index
    %c0_19 = arith.constant 0 : index
    %25 = vector.load %arg8[%c0_18, %c0_19] : memref<140x128xf32, #tpu.memory_space<vmem>>, vector<140x128xf32>
    %cst_20 = arith.constant dense<0.000000e+00> : vector<8x128xf32>
    %26 = tpu.matmul %24, %25, %cst_20 {dimension_numbers = #tpu.dot_dimension_numbers<[1], [0], [0], [1], [0, 0, 1, 1], [], []>} : vector<8x140xf32>, vector<140x128xf32>, vector<8x128xf32> -> vector<8x128xf32>
    %c0_21 = arith.constant 0 : index
    %c0_22 = arith.constant 0 : index
    %27 = vector.load %arg9[%c0_21, %c0_22] : memref<1x128xf32, #tpu.memory_space<vmem>>, vector<1x128xf32>
    %28 = vector.broadcast %27 : vector<1x128xf32> to vector<8x128xf32>
    %29 = arith.addf %26, %28 : vector<8x128xf32>
    %c0_23 = arith.constant 0 : index
    %c0_24 = arith.constant 0 : index
    %30 = vector.load %arg10[%c0_23, %c0_24] : memref<8x128xf32, #tpu.memory_space<vmem>>, vector<8x128xf32>
    tpu.vector_store %arg10[%c0_23, %c0_24], %29 {strides = array<i32>} : memref<8x128xf32, #tpu.memory_space<vmem>>, vector<8x128xf32>,
    return
  }
  func.func @transform_0(%arg0: i32) -> (i32, i32) {
    %c0_i32 = arith.constant 0 : i32
    %c0_i32_0 = arith.constant 0 : i32
    return %arg0, %c0_i32 : i32, i32
  }
  func.func @transform_1(%arg0: i32) -> (i32, i32) {
    %c0_i32 = arith.constant 0 : i32
    %c0_i32_0 = arith.constant 0 : i32
    %c0_i32_1 = arith.constant 0 : i32
    return %c0_i32, %c0_i32_0 : i32, i32
  }
  func.func @transform_2(%arg0: i32) -> (i32, i32) {
    %c0_i32 = arith.constant 0 : i32
    %c0_i32_0 = arith.constant 0 : i32
    %c0_i32_1 = arith.constant 0 : i32
    return %c0_i32, %c0_i32_0 : i32, i32
  }
  func.func @transform_3(%arg0: i32) -> (i32, i32) {
    %c0_i32 = arith.constant 0 : i32
    %c0_i32_0 = arith.constant 0 : i32
    %c0_i32_1 = arith.constant 0 : i32
    return %c0_i32, %c0_i32_0 : i32, i32
  }
  func.func @transform_4(%arg0: i32) -> (i32, i32) {
    %c0_i32 = arith.constant 0 : i32
    %c0_i32_0 = arith.constant 0 : i32
    %c0_i32_1 = arith.constant 0 : i32
    return %c0_i32, %c0_i32_0 : i32, i32
  }
  func.func @transform_5(%arg0: i32) -> (i32, i32) {
    %c0_i32 = arith.constant 0 : i32
    %c0_i32_0 = arith.constant 0 : i32
    %c0_i32_1 = arith.constant 0 : i32
    return %c0_i32, %c0_i32_0 : i32, i32
  }
  func.func @transform_6(%arg0: i32) -> (i32, i32) {
    %c0_i32 = arith.constant 0 : i32
    %c0_i32_0 = arith.constant 0 : i32
    %c0_i32_1 = arith.constant 0 : i32
    return %c0_i32, %c0_i32_0 : i32, i32
  }
  func.func @transform_7(%arg0: i32) -> (i32, i32) {
    %c0_i32 = arith.constant 0 : i32
    %c0_i32_0 = arith.constant 0 : i32
    %c0_i32_1 = arith.constant 0 : i32
    return %c0_i32, %c0_i32_0 : i32, i32
  }
  func.func @transform_8(%arg0: i32) -> (i32, i32) {
    %c0_i32 = arith.constant 0 : i32
    %c0_i32_0 = arith.constant 0 : i32
    %c0_i32_1 = arith.constant 0 : i32
    return %c0_i32, %c0_i32_0 : i32, i32
  }
  func.func @transform_9(%arg0: i32) -> (i32, i32) {
    %c0_i32 = arith.constant 0 : i32
    %c0_i32_0 = arith.constant 0 : i32
    return %arg0, %c0_i32 : i32, i32
  }
}

</mosaic_0001>

<llo_original>
// kernel: tl_faces_00_forward.1
$region0: #{tl_faces_00_forward.1}
  #allocation0 [shape = 'u32[]', space=smem, size = 0x4, offset = 0x4, fixed_abs, tag = 'smem constant byte address 0x4 - core index']
  #allocation1 [shape = 'u32[144,128]{1,0:T(1,128)}', space=vmem, size = 0x12000, scoped, tag = 'internal scratch']
  %s0 = inlined_call_operand.vmem [shape: f32[8,225], index: 0, kind: input, shape index: {}]
  %s1 = inlined_call_operand.vmem [shape: f32[225,200], index: 1, kind: input, shape index: {}]
  %s2 = inlined_call_operand.vmem [shape: f32[1,200], index: 2, kind: input, shape index: {}]
  %s3 = inlined_call_operand.vmem [shape: f32[200,170], index: 3, kind: input, shape index: {}]
  %s4 = inlined_call_operand.vmem [shape: f32[1,170], index: 4, kind: input, shape index: {}]
  %s5 = inlined_call_operand.vmem [shape: f32[170,140], index: 5, kind: input, shape index: {}]
  %s6 = inlined_call_operand.vmem [shape: f32[1,140], index: 6, kind: input, shape index: {}]
  %s7 = inlined_call_operand.vmem [shape: f32[140,128], index: 7, kind: input, shape index: {}]
  %s8 = inlined_call_operand.vmem [shape: f32[1,128], index: 8, kind: input, shape index: {}]
  %s9 = inlined_call_operand.hbm [shape: f32[8,128], index: 9, kind: output, shape index: {}]
  %s10 = sld [smem:[#allocation0]]
  $region46: #{tl_faces_00_forward.1} parent=0
    _
  %s12 = ssub.s32 1, %s10
  %s13 = scalar_select 0, %s12, %s10
  $region1: #{tl_faces_00_forward.1} parent=0
    #allocation2 [shape = 'u8[4096]{0}', space=vmem, size = 0x1000, scoped, tag = 'output window, operand 0, single buffered']
    #allocation3 [shape = 's32[1]{0}', space=sflag, size = 0x4, scoped, tag = 'scoped memory for tl_faces_00_forward.1']
    %14 = vsyncpa [#allocation3], 0
    // Predicated region
    $region2: #{tl_faces_00_forward.1} parent=1 // pred_check
      _
    $region3: #{tl_faces_00_forward.1} parent=1 // pred_check_branch
      %16 = sbr.rel (0) target = $region5
    $region4: #{tl_faces_00_forward.1} parent=1 // pred_region
      _
    $region5: #{tl_faces_00_forward.1} parent=1 // pred_fallthru
      _
    // Predicated region
    $region6: #{tl_faces_00_forward.1} parent=1 // pred_check
      _
    $region7: #{tl_faces_00_forward.1} parent=1 // pred_check_branch
      %18 = sbr.rel (0) target = $region9
    $region8: #{tl_faces_00_forward.1} parent=1 // pred_region
      _
    $region9: #{tl_faces_00_forward.1} parent=1 // pred_fallthru
      _
    // Predicated region
    $region10: #{tl_faces_00_forward.1} parent=1 // pred_check
      _
    $region11: #{tl_faces_00_forward.1} parent=1 // pred_check_branch
      %20 = sbr.rel (0) target = $region13
    $region12: #{tl_faces_00_forward.1} parent=1 // pred_region
      _
    $region13: #{tl_faces_00_forward.1} parent=1 // pred_fallthru
      _
    // Predicated region
    $region14: #{tl_faces_00_forward.1} parent=1 // pred_check
      _
    $region15: #{tl_faces_00_forward.1} parent=1 // pred_check_branch
      %22 = sbr.rel (0) target = $region17
    $region16: #{tl_faces_00_forward.1} parent=1 // pred_region
      _
    $region17: #{tl_faces_00_forward.1} parent=1 // pred_fallthru
      _
    // Predicated region
    $region18: #{tl_faces_00_forward.1} parent=1 // pred_check
      _
    $region19: #{tl_faces_00_forward.1} parent=1 // pred_check_branch
      %24 = sbr.rel (0) target = $region21
    $region20: #{tl_faces_00_forward.1} parent=1 // pred_region
      _
    $region21: #{tl_faces_00_forward.1} parent=1 // pred_fallthru
      _
    // Predicated region
    $region22: #{tl_faces_00_forward.1} parent=1 // pred_check
      _
    $region23: #{tl_faces_00_forward.1} parent=1 // pred_check_branch
      %26 = sbr.rel (0) target = $region25
    $region24: #{tl_faces_00_forward.1} parent=1 // pred_region
      _
    $region25: #{tl_faces_00_forward.1} parent=1 // pred_fallthru
      _
    // Predicated region
    $region26: #{tl_faces_00_forward.1} parent=1 // pred_check
      _
    $region27: #{tl_faces_00_forward.1} parent=1 // pred_check_branch
      %28 = sbr.rel (0) target = $region29
    $region28: #{tl_faces_00_forward.1} parent=1 // pred_region
      _
    $region29: #{tl_faces_00_forward.1} parent=1 // pred_fallthru
      _
    // Predicated region
    $region30: #{tl_faces_00_forward.1} parent=1 // pred_check
      _
    $region31: #{tl_faces_00_forward.1} parent=1 // pred_check_branch
      %30 = sbr.rel (0) target = $region33
    $region32: #{tl_faces_00_forward.1} parent=1 // pred_region
      _
    $region33: #{tl_faces_00_forward.1} parent=1 // pred_fallthru
      _
    // Predicated region
    $region34: #{tl_faces_00_forward.1} parent=1 // pred_check
      _
    $region35: #{tl_faces_00_forward.1} parent=1 // pred_check_branch
      %32 = sbr.rel (0) target = $region37
    $region36: #{tl_faces_00_forward.1} parent=1 // pred_region
      _
    $region37: #{tl_faces_00_forward.1} parent=1 // pred_fallthru
      _
    %v33 = vld [vmem:[%s0] sm:$0xff]
    %v34 = vld [vmem:[%s0 + $0x8] sm:$0xff]
    %v35 = vld [vmem:[%s1] sm:$0xff]
    %v36 = vld [vmem:[%s1 + $0x8] sm:$0xff]
    %v37 = vld [vmem:[%s1 + $0x10] sm:$0xff]
    %v38 = vld [vmem:[%s1 + $0x18] sm:$0xff]
    %v39 = vld [vmem:[%s1 + $0x20] sm:$0xff]
    %v40 = vld [vmem:[%s1 + $0x28] sm:$0xff]
    %v41 = vld [vmem:[%s1 + $0x30] sm:$0xff]
    %v42 = vld [vmem:[%s1 + $0x38] sm:$0xff]
    %v43 = vld [vmem:[%s1 + $0x40] sm:$0xff]
    %v44 = vld [vmem:[%s1 + $0x48] sm:$0xff]
    %v45 = vld [vmem:[%s1 + $0x50] sm:$0xff]
    %v46 = vld [vmem:[%s1 + $0x58] sm:$0xff]
    %v47 = vld [vmem:[%s1 + $0x60] sm:$0xff]
    %v48 = vld [vmem:[%s1 + $0x68] sm:$0xff]
    %v49 = vld [vmem:[%s1 + $0x70] sm:$0xff]
    %v50 = vld [vmem:[%s1 + $0x78] sm:$0xff]
    %v51 = vld [vmem:[%s1 + $0x80] sm:$0xff]
    %v52 = vld [vmem:[%s1 + $0x88] sm:$0xff]
    %v53 = vld [vmem:[%s1 + $0x90] sm:$0xff]
    %v54 = vld [vmem:[%s1 + $0x98] sm:$0xff]
    %v55 = vld [vmem:[%s1 + $0xa0] sm:$0xff]
    %v56 = vld [vmem:[%s1 + $0xa8] sm:$0xff]
    %v57 = vld [vmem:[%s1 + $0xb0] sm:$0xff]
    %v58 = vld [vmem:[%s1 + $0xb8] sm:$0xff]
    %v59 = vld [vmem:[%s1 + $0xc0] sm:$0xff]
    %v60 = vld [vmem:[%s1 + $0xc8] sm:$0xff]
    %v61 = vld [vmem:[%s1 + $0xd0] sm:$0xff]
    %v62 = vld [vmem:[%s1 + $0xd8] sm:$0xff]
    %v63 = vld [vmem:[%s1 + $0xe0] sm:$0xff]
    %v64 = vld [vmem:[%s1 + $0xe8] sm:$0xff]
    %v65 = vld [vmem:[%s1 + $0xf0] sm:$0xff]
    %v66 = vld [vmem:[%s1 + $0xf8] sm:$0xff]
    %v67 = vld [vmem:[%s1 + $0x100] sm:$0xff]
    %v68 = vld [vmem:[%s1 + $0x108] sm:$0xff]
    %v69 = vld [vmem:[%s1 + $0x110] sm:$0xff]
    %v70 = vld [vmem:[%s1 + $0x118] sm:$0xff]
    %v71 = vld [vmem:[%s1 + $0x120] sm:$0xff]
    %v72 = vld [vmem:[%s1 + $0x128] sm:$0xff]
    %v73 = vld [vmem:[%s1 + $0x130] sm:$0xff]
    %v74 = vld [vmem:[%s1 + $0x138] sm:$0xff]
    %v75 = vld [vmem:[%s1 + $0x140] sm:$0xff]
    %v76 = vld [vmem:[%s1 + $0x148] sm:$0xff]
    %v77 = vld [vmem:[%s1 + $0x150] sm:$0xff]
    %v78 = vld [vmem:[%s1 + $0x158] sm:$0xff]
    %v79 = vld [vmem:[%s1 + $0x160] sm:$0xff]
    %v80 = vld [vmem:[%s1 + $0x168] sm:$0xff]
    %v81 = vld [vmem:[%s1 + $0x170] sm:$0xff]
    %v82 = vld [vmem:[%s1 + $0x178] sm:$0xff]
    %v83 = vld [vmem:[%s1 + $0x180] sm:$0xff]
    %v84 = vld [vmem:[%s1 + $0x188] sm:$0xff]
    %v85 = vld [vmem:[%s1 + $0x190] sm:$0xff]
    %v86 = vld [vmem:[%s1 + $0x198] sm:$0xff]
    %v87 = vld [vmem:[%s1 + $0x1a0] sm:$0xff]
    %v88 = vld [vmem:[%s1 + $0x1a8] sm:$0xff]
    %v89 = vld [vmem:[%s1 + $0x1b0] sm:$0xff]
    %v90 = vld [vmem:[%s1 + $0x1b8] sm:$0xff]
    %v91 = vld [vmem:[%s1 + $0x1c0] sm:$0x1]
    %v92 = vld [vmem:[%s1 + $0x1c8] sm:$0x1]
    %v93 = vld [vmem:[%s2] sm:$0x3]
    %v95 = vlaneseq
    %v96 = vshrl.u32 %v95, 7
    %v97 = vsub.s32 0, %v96
    %v98 = vrot.slane %v93, %v97
    %v99 = vlaneseq
    %v100 = vshrl.u32 %v99, 7
    %v101 = vsub.s32 1, %v100
    %v102 = vrot.slane %v93, %v101
    %vm105 = vcmask 793600
    %v107 = vsel %vm105, %v34, 0
    %vm109 = vcmask 1040384
    %v111 = vsel %vm109, %v91, 0
    %v114 = vsel %vm109, %v92, 0
    %116 = vmatprep.subr.mxu0 %v36
    %117 = vmatpush1.msra.mxu0 %v35
    %118 = vmatprep.subr.mxu0 %v38
    %119 = vmatpush1.msra.mxu0 %v37
    %120 = vmatprep.subr.mxu0 %v40
    %121 = vmatpush1.msra.mxu0 %v39
    %122 = vmatprep.subr.mxu0 %v42
    %123 = vmatpush1.msra.mxu0 %v41
    %124 = vmatprep.subr.mxu0 %v44
    %125 = vmatpush1.msra.mxu0 %v43
    %126 = vmatprep.subr.mxu0 %v46
    %127 = vmatpush1.msra.mxu0 %v45
    %128 = vmatprep.subr.mxu0 %v48
    %129 = vmatpush1.msra.mxu0 %v47
    %130 = vmatprep.subr.mxu0 %v50
    %131 = vmatpush1.msra.mxu0 %v49
    %132 = vmatprep.subr.mxu0 %v52
    %133 = vmatpush1.msra.mxu0 %v51
    %134 = vmatprep.subr.mxu0 %v54
    %135 = vmatpush1.msra.mxu0 %v53
    %136 = vmatprep.subr.mxu0 %v56
    %137 = vmatpush1.msra.mxu0 %v55
    %138 = vmatprep.subr.mxu0 %v58
    %139 = vmatpush1.msra.mxu0 %v57
    %140 = vmatprep.subr.mxu0 %v60
    %141 = vmatpush1.msra.mxu0 %v59
    %142 = vmatprep.subr.mxu0 %v62
    %143 = vmatpush1.msra.mxu0 %v61
    %144 = vmatprep.subr.mxu0 %v64
    %145 = vmatpush1.msra.mxu0 %v63
    %146 = vmatprep.subr.mxu0 %v66
    %147 = vmatpush1.msra.mxu0 %v65
    %148 = vmatprep.subr.mxu0 %v68
    %149 = vmatpush1.msra.mxu0 %v67
    %150 = vmatprep.subr.mxu0 %v70
    %151 = vmatpush1.msra.mxu0 %v69
    %152 = vmatprep.subr.mxu0 %v72
    %153 = vmatpush1.msra.mxu0 %v71
    %154 = vmatprep.subr.mxu0 %v74
    %155 = vmatpush1.msra.mxu0 %v73
    %156 = vmatprep.subr.mxu0 %v76
    %157 = vmatpush1.msra.mxu0 %v75
    %158 = vmatprep.subr.mxu0 %v78
    %159 = vmatpush1.msra.mxu0 %v77
    %160 = vmatprep.subr.mxu0 %v80
    %161 = vmatpush1.msra.mxu0 %v79
    %162 = vmatprep.subr.mxu0 %v82
    %163 = vmatpush1.msra.mxu0 %v81
    %164 = vmatprep.subr.mxu0 %v84
    %165 = vmatpush1.msra.mxu0 %v83
    %166 = vmatprep.subr.mxu0 %v86
    %167 = vmatpush1.msra.mxu0 %v85
    %168 = vmatprep.subr.mxu0 %v88
    %169 = vmatpush1.msra.mxu0 %v87
    %170 = vmatprep.subr.mxu0 %v90
    %171 = vmatpush1.msra.mxu0 %v89
    %172 = vmatprep.subr.mxu0 %v114
    %173 = vmatpush1.msra.mxu0 %v111
    %174 = vmatprep.subr.mxu0 0.0
    %175 = vmatpush1.msra.mxu0 0.0
    %176 = vmatprep.subr.mxu0 0.0
    %177 = vmatpush1.msra.mxu0 0.0
    %178 = vmatprep.subr.mxu0 0.0
    %179 = vmatpush1.msra.mxu0 0.0
    %180 = vmatprep.mubr.f32.mxu0 %v107
    %181 = vmatmul.mubr.f32.gmra.mrb[0].mxu0 %v33
    %v182 = vpop.f32.mrb[0].mxu0
    %v183 = vadd.f32 %v98, %v182
    %v184 = vpop.f32.mrb[0].mxu0
    %v185 = vadd.f32 %v102, %v184
    %186 = vdwg.mxu0
    %v187 = vmul.f32 %v183, 0.05
    %v188 = vmul.f32 %v185, 0.05
    %v189 = vmax.f32 %v183, %v187
    %v190 = vmax.f32 %v185, %v188
    %v191 = vld [vmem:[%s3] sm:$0xff]
    %v192 = vld [vmem:[%s3 + $0x8] sm:$0xff]
    %v193 = vld [vmem:[%s3 + $0x10] sm:$0xff]
    %v194 = vld [vmem:[%s3 + $0x18] sm:$0xff]
    %v195 = vld [vmem:[%s3 + $0x20] sm:$0xff]
    %v196 = vld [vmem:[%s3 + $0x28] sm:$0xff]
    %v197 = vld [vmem:[%s3 + $0x30] sm:$0xff]
    %v198 = vld [vmem:[%s3 + $0x38] sm:$0xff]
    %v199 = vld [vmem:[%s3 + $0x40] sm:$0xff]
    %v200 = vld [vmem:[%s3 + $0x48] sm:$0xff]
    %v201 = vld [vmem:[%s3 + $0x50] sm:$0xff]
    %v202 = vld [vmem:[%s3 + $0x58] sm:$0xff]
    %v203 = vld [vmem:[%s3 + $0x60] sm:$0xff]
    %v204 = vld [vmem:[%s3 + $0x68] sm:$0xff]
    %v205 = vld [vmem:[%s3 + $0x70] sm:$0xff]
    %v206 = vld [vmem:[%s3 + $0x78] sm:$0xff]
    %v207 = vld [vmem:[%s3 + $0x80] sm:$0xff]
    %v208 = vld [vmem:[%s3 + $0x88] sm:$0xff]
    %v209 = vld [vmem:[%s3 + $0x90] sm:$0xff]
    %v210 = vld [vmem:[%s3 + $0x98] sm:$0xff]
    %v211 = vld [vmem:[%s3 + $0xa0] sm:$0xff]
    %v212 = vld [vmem:[%s3 + $0xa8] sm:$0xff]
    %v213 = vld [vmem:[%s3 + $0xb0] sm:$0xff]
    %v214 = vld [vmem:[%s3 + $0xb8] sm:$0xff]
    %v215 = vld [vmem:[%s3 + $0xc0] sm:$0xff]
    %v216 = vld [vmem:[%s3 + $0xc8] sm:$0xff]
    %v217 = vld [vmem:[%s3 + $0xd0] sm:$0xff]
    %v218 = vld [vmem:[%s3 + $0xd8] sm:$0xff]
    %v219 = vld [vmem:[%s3 + $0xe0] sm:$0xff]
    %v220 = vld [vmem:[%s3 + $0xe8] sm:$0xff]
    %v221 = vld [vmem:[%s3 + $0xf0] sm:$0xff]
    %v222 = vld [vmem:[%s3 + $0xf8] sm:$0xff]
    %v223 = vld [vmem:[%s3 + $0x100] sm:$0xff]
    %v224 = vld [vmem:[%s3 + $0x108] sm:$0xff]
    %v225 = vld [vmem:[%s3 + $0x110] sm:$0xff]
    %v226 = vld [vmem:[%s3 + $0x118] sm:$0xff]
    %v227 = vld [vmem:[%s3 + $0x120] sm:$0xff]
    %v228 = vld [vmem:[%s3 + $0x128] sm:$0xff]
    %v229 = vld [vmem:[%s3 + $0x130] sm:$0xff]
    %v230 = vld [vmem:[%s3 + $0x138] sm:$0xff]
    %v231 = vld [vmem:[%s3 + $0x140] sm:$0xff]
    %v232 = vld [vmem:[%s3 + $0x148] sm:$0xff]
    %v233 = vld [vmem:[%s3 + $0x150] sm:$0xff]
    %v234 = vld [vmem:[%s3 + $0x158] sm:$0xff]
    %v235 = vld [vmem:[%s3 + $0x160] sm:$0xff]
    %v236 = vld [vmem:[%s3 + $0x168] sm:$0xff]
    %v237 = vld [vmem:[%s3 + $0x170] sm:$0xff]
    %v238 = vld [vmem:[%s3 + $0x178] sm:$0xff]
    %v239 = vld [vmem:[%s3 + $0x180] sm:$0xff]
    %v240 = vld [vmem:[%s3 + $0x188] sm:$0xff]
    %v241 = vld [vmem:[%s4] sm:$0x3]
    %v243 = vlaneseq
    %v244 = vshrl.u32 %v243, 7
    %v245 = vsub.s32 0, %v244
    %v246 = vrot.slane %v241, %v245
    %v247 = vlaneseq
    %v248 = vshrl.u32 %v247, 7
    %v249 = vsub.s32 1, %v248
    %v250 = vrot.slane %v241, %v249
    %vm253 = vcmask 588800
    %v255 = vsel %vm253, %v190, 0
    %257 = vmatprep.subr.mxu0 %v192
    %258 = vmatpush1.msra.mxu0 %v191
    %259 = vmatprep.subr.mxu0 %v194
    %260 = vmatpush1.msra.mxu0 %v193
    %261 = vmatprep.subr.mxu0 %v196
    %262 = vmatpush1.msra.mxu0 %v195
    %263 = vmatprep.subr.mxu0 %v198
    %264 = vmatpush1.msra.mxu0 %v197
    %265 = vmatprep.subr.mxu0 %v200
    %266 = vmatpush1.msra.mxu0 %v199
    %267 = vmatprep.subr.mxu0 %v202
    %268 = vmatpush1.msra.mxu0 %v201
    %269 = vmatprep.subr.mxu0 %v204
    %270 = vmatpush1.msra.mxu0 %v203
    %271 = vmatprep.subr.mxu0 %v206
    %272 = vmatpush1.msra.mxu0 %v205
    %273 = vmatprep.subr.mxu0 %v208
    %274 = vmatpush1.msra.mxu0 %v207
    %275 = vmatprep.subr.mxu0 %v210
    %276 = vmatpush1.msra.mxu0 %v209
    %277 = vmatprep.subr.mxu0 %v212
    %278 = vmatpush1.msra.mxu0 %v211
    %279 = vmatprep.subr.mxu0 %v214
    %280 = vmatpush1.msra.mxu0 %v213
    %281 = vmatprep.subr.mxu0 %v216
    %282 = vmatpush1.msra.mxu0 %v215
    %283 = vmatprep.subr.mxu0 %v218
    %284 = vmatpush1.msra.mxu0 %v217
    %285 = vmatprep.subr.mxu0 %v220
    %286 = vmatpush1.msra.mxu0 %v219
    %287 = vmatprep.subr.mxu0 %v222
    %288 = vmatpush1.msra.mxu0 %v221
    %289 = vmatprep.subr.mxu0 %v224
    %290 = vmatpush1.msra.mxu0 %v223
    %291 = vmatprep.subr.mxu0 %v226
    %292 = vmatpush1.msra.mxu0 %v225
    %293 = vmatprep.subr.mxu0 %v228
    %294 = vmatpush1.msra.mxu0 %v227
    %295 = vmatprep.subr.mxu0 %v230
    %296 = vmatpush1.msra.mxu0 %v229
    %297 = vmatprep.subr.mxu0 %v232
    %298 = vmatpush1.msra.mxu0 %v231
    %299 = vmatprep.subr.mxu0 %v234
    %300 = vmatpush1.msra.mxu0 %v233
    %301 = vmatprep.subr.mxu0 %v236
    %302 = vmatpush1.msra.mxu0 %v235
    %303 = vmatprep.subr.mxu0 %v238
    %304 = vmatpush1.msra.mxu0 %v237
    %305 = vmatprep.subr.mxu0 %v240
    %306 = vmatpush1.msra.mxu0 %v239
    %307 = vmatprep.subr.mxu0 0.0
    %308 = vmatpush1.msra.mxu0 0.0
    %309 = vmatprep.subr.mxu0 0.0
    %310 = vmatpush1.msra.mxu0 0.0
    %311 = vmatprep.subr.mxu0 0.0
    %312 = vmatpush1.msra.mxu0 0.0
    %313 = vmatprep.subr.mxu0 0.0
    %314 = vmatpush1.msra.mxu0 0.0
    %315 = vmatprep.subr.mxu0 0.0
    %316 = vmatpush1.msra.mxu0 0.0
    %317 = vmatprep.subr.mxu0 0.0
    %318 = vmatpush1.msra.mxu0 0.0
    %319 = vmatprep.subr.mxu0 0.0
    %320 = vmatpush1.msra.mxu0 0.0
    %321 = vmatprep.mubr.f32.mxu0 %v255
    %322 = vmatmul.mubr.f32.gmra.mrb[0].mxu0 %v189
    %v323 = vpop.f32.mrb[0].mxu0
    %v324 = vadd.f32 %v246, %v323
    %v325 = vpop.f32.mrb[0].mxu0
    %v326 = vadd.f32 %v250, %v325
    %327 = vdwg.mxu0
    %v328 = vmul.f32 %v324, 0.05
    %v329 = vmul.f32 %v326, 0.05
    %v330 = vmax.f32 %v324, %v328
    %v331 = vmax.f32 %v326, %v329
    %v332 = vld [vmem:[%s5] sm:$0xff]
    %v333 = vld [vmem:[%s5 + $0x8] sm:$0xff]
    %v334 = vld [vmem:[%s5 + $0x10] sm:$0xff]
    %v335 = vld [vmem:[%s5 + $0x18] sm:$0xff]
    %v336 = vld [vmem:[%s5 + $0x20] sm:$0xff]
    %v337 = vld [vmem:[%s5 + $0x28] sm:$0xff]
    %v338 = vld [vmem:[%s5 + $0x30] sm:$0xff]
    %v339 = vld [vmem:[%s5 + $0x38] sm:$0xff]
    %v340 = vld [vmem:[%s5 + $0x40] sm:$0xff]
    %v341 = vld [vmem:[%s5 + $0x48] sm:$0xff]
    %v342 = vld [vmem:[%s5 + $0x50] sm:$0xff]
    %v343 = vld [vmem:[%s5 + $0x58] sm:$0xff]
    %v344 = vld [vmem:[%s5 + $0x60] sm:$0xff]
    %v345 = vld [vmem:[%s5 + $0x68] sm:$0xff]
    %v346 = vld [vmem:[%s5 + $0x70] sm:$0xff]
    %v347 = vld [vmem:[%s5 + $0x78] sm:$0xff]
    %v348 = vld [vmem:[%s5 + $0x80] sm:$0xff]
    %v349 = vld [vmem:[%s5 + $0x88] sm:$0xff]
    %v350 = vld [vmem:[%s5 + $0x90] sm:$0xff]
    %v351 = vld [vmem:[%s5 + $0x98] sm:$0xff]
    %v352 = vld [vmem:[%s5 + $0xa0] sm:$0xff]
    %v353 = vld [vmem:[%s5 + $0xa8] sm:$0xff]
    %v354 = vld [vmem:[%s5 + $0xb0] sm:$0xff]
    %v355 = vld [vmem:[%s5 + $0xb8] sm:$0xff]
    %v356 = vld [vmem:[%s5 + $0xc0] sm:$0xff]
    %v357 = vld [vmem:[%s5 + $0xc8] sm:$0xff]
    %v358 = vld [vmem:[%s5 + $0xd0] sm:$0xff]
    %v359 = vld [vmem:[%s5 + $0xd8] sm:$0xff]
    %v360 = vld [vmem:[%s5 + $0xe0] sm:$0xff]
    %v361 = vld [vmem:[%s5 + $0xe8] sm:$0xff]
    %v362 = vld [vmem:[%s5 + $0xf0] sm:$0xff]
    %v363 = vld [vmem:[%s5 + $0xf8] sm:$0xff]
    %v364 = vld [vmem:[%s5 + $0x100] sm:$0xff]
    %v365 = vld [vmem:[%s5 + $0x108] sm:$0xff]
    %v366 = vld [vmem:[%s5 + $0x110] sm:$0xff]
    %v367 = vld [vmem:[%s5 + $0x118] sm:$0xff]
    %v368 = vld [vmem:[%s5 + $0x120] sm:$0xff]
    %v369 = vld [vmem:[%s5 + $0x128] sm:$0xff]
    %v370 = vld [vmem:[%s5 + $0x130] sm:$0xff]
    %v371 = vld [vmem:[%s5 + $0x138] sm:$0xff]
    %v372 = vld [vmem:[%s5 + $0x140] sm:$0xff]
    %v373 = vld [vmem:[%s5 + $0x148] sm:$0xff]
    %v374 = vld [vmem:[%s5 + $0x150] sm:$0x3]
    %v375 = vld [vmem:[%s5 + $0x158] sm:$0x3]
    %v376 = vld [vmem:[%s6] sm:$0x3]
    %v378 = vlaneseq
    %v379 = vshrl.u32 %v378, 7
    %v380 = vsub.s32 0, %v379
    %v381 = vrot.slane %v376, %v380
    %v382 = vlaneseq
    %v383 = vshrl.u32 %v382, 7
    %v384 = vsub.s32 1, %v383
    %v385 = vrot.slane %v376, %v384
    %vm388 = vcmask 343040
    %v390 = vsel %vm388, %v331, 0
    %vm392 = vcmask 1041408
    %v394 = vsel %vm392, %v374, 0
    %v397 = vsel %vm392, %v375, 0
    %399 = vmatprep.subr.mxu0 %v333
    %400 = vmatpush1.msra.mxu0 %v332
    %401 = vmatprep.subr.mxu0 %v335
    %402 = vmatpush1.msra.mxu0 %v334
    %403 = vmatprep.subr.mxu0 %v337
    %404 = vmatpush1.msra.mxu0 %v336
    %405 = vmatprep.subr.mxu0 %v339
    %406 = vmatpush1.msra.mxu0 %v338
    %407 = vmatprep.subr.mxu0 %v341
    %408 = vmatpush1.msra.mxu0 %v340
    %409 = vmatprep.subr.mxu0 %v343
    %410 = vmatpush1.msra.mxu0 %v342
    %411 = vmatprep.subr.mxu0 %v345
    %412 = vmatpush1.msra.mxu0 %v344
    %413 = vmatprep.subr.mxu0 %v347
    %414 = vmatpush1.msra.mxu0 %v346
    %415 = vmatprep.subr.mxu0 %v349
    %416 = vmatpush1.msra.mxu0 %v348
    %417 = vmatprep.subr.mxu0 %v351
    %418 = vmatpush1.msra.mxu0 %v350
    %419 = vmatprep.subr.mxu0 %v353
    %420 = vmatpush1.msra.mxu0 %v352
    %421 = vmatprep.subr.mxu0 %v355
    %422 = vmatpush1.msra.mxu0 %v354
    %423 = vmatprep.subr.mxu0 %v357
    %424 = vmatpush1.msra.mxu0 %v356
    %425 = vmatprep.subr.mxu0 %v359
    %426 = vmatpush1.msra.mxu0 %v358
    %427 = vmatprep.subr.mxu0 %v361
    %428 = vmatpush1.msra.mxu0 %v360
    %429 = vmatprep.subr.mxu0 %v363
    %430 = vmatpush1.msra.mxu0 %v362
    %431 = vmatprep.subr.mxu0 %v365
    %432 = vmatpush1.msra.mxu0 %v364
    %433 = vmatprep.subr.mxu0 %v367
    %434 = vmatpush1.msra.mxu0 %v366
    %435 = vmatprep.subr.mxu0 %v369
    %436 = vmatpush1.msra.mxu0 %v368
    %437 = vmatprep.subr.mxu0 %v371
    %438 = vmatpush1.msra.mxu0 %v370
    %439 = vmatprep.subr.mxu0 %v373
    %440 = vmatpush1.msra.mxu0 %v372
    %441 = vmatprep.subr.mxu0 %v397
    %442 = vmatpush1.msra.mxu0 %v394
    %443 = vmatprep.subr.mxu0 0.0
    %444 = vmatpush1.msra.mxu0 0.0
    %445 = vmatprep.subr.mxu0 0.0
    %446 = vmatpush1.msra.mxu0 0.0
    %447 = vmatprep.subr.mxu0 0.0
    %448 = vmatpush1.msra.mxu0 0.0
    %449 = vmatprep.subr.mxu0 0.0
    %450 = vmatpush1.msra.mxu0 0.0
    %451 = vmatprep.subr.mxu0 0.0
    %452 = vmatpush1.msra.mxu0 0.0
    %453 = vmatprep.subr.mxu0 0.0
    %454 = vmatpush1.msra.mxu0 0.0
    %455 = vmatprep.subr.mxu0 0.0
    %456 = vmatpush1.msra.mxu0 0.0
    %457 = vmatprep.subr.mxu0 0.0
    %458 = vmatpush1.msra.mxu0 0.0
    %459 = vmatprep.subr.mxu0 0.0
    %460 = vmatpush1.msra.mxu0 0.0
    %461 = vmatprep.subr.mxu0 0.0
    %462 = vmatpush1.msra.mxu0 0.0
    %463 = vmatprep.mubr.f32.mxu0 %v390
    %464 = vmatmul.mubr.f32.gmra.mrb[0].mxu0 %v330
    %v465 = vpop.f32.mrb[0].mxu0
    %v466 = vadd.f32 %v381, %v465
    %v467 = vpop.f32.mrb[0].mxu0
    %v468 = vadd.f32 %v385, %v467
    %469 = vdwg.mxu0
    %v470 = vmul.f32 %v466, 0.05
    %v471 = vmul.f32 %v468, 0.05
    %v472 = vmax.f32 %v466, %v470
    %v473 = vmax.f32 %v468, %v471
    %v474 = vld [vmem:[%s7] sm:$0xff]
    %v475 = vld [vmem:[%s7 + $0x8] sm:$0xff]
    %v476 = vld [vmem:[%s7 + $0x10] sm:$0xff]
    %v477 = vld [vmem:[%s7 + $0x18] sm:$0xff]
    %v478 = vld [vmem:[%s7 + $0x20] sm:$0xff]
    %v479 = vld [vmem:[%s7 + $0x28] sm:$0xff]
    %v480 = vld [vmem:[%s7 + $0x30] sm:$0xff]
    %v481 = vld [vmem:[%s7 + $0x38] sm:$0xff]
    %v482 = vld [vmem:[%s7 + $0x40] sm:$0xff]
    %v483 = vld [vmem:[%s7 + $0x48] sm:$0xff]
    %v484 = vld [vmem:[%s7 + $0x50] sm:$0xff]
    %v485 = vld [vmem:[%s7 + $0x58] sm:$0xff]
    %v486 = vld [vmem:[%s7 + $0x60] sm:$0xff]
    %v487 = vld [vmem:[%s7 + $0x68] sm:$0xff]
    %v488 = vld [vmem:[%s7 + $0x70] sm:$0xff]
    %v489 = vld [vmem:[%s7 + $0x78] sm:$0xff]
    %v490 = vld [vmem:[%s7 + $0x80] sm:$0xff]
    %v491 = vld [vmem:[%s7 + $0x88] sm:$0xf]
    %v492 = vld [vmem:[%s8] sm:$0x1]
    %v494 = vlaneseq
    %v495 = vshrl.u32 %v494, 7
    %v496 = vsub.s32 0, %v495
    %v497 = vrot.slane %v492, %v496
    %vm499 = vcmask 97280
    %v501 = vsel %vm499, %v473, 0
    %vm503 = vcmask 1043456
    %v505 = vsel %vm503, %v491, 0
    %507 = vmatprep.subr.mxu0 0.0
    %508 = vmatpush1.msra.mxu0 %v474
    %509 = vmatprep.subr.mxu0 0.0
    %510 = vmatpush1.msra.mxu0 %v475
    %511 = vmatprep.subr.mxu0 0.0
    %512 = vmatpush1.msra.mxu0 %v476
    %513 = vmatprep.subr.mxu0 0.0
    %514 = vmatpush1.msra.mxu0 %v477
    %515 = vmatprep.subr.mxu0 0.0
    %516 = vmatpush1.msra.mxu0 %v478
    %517 = vmatprep.subr.mxu0 0.0
    %518 = vmatpush1.msra.mxu0 %v479
    %519 = vmatprep.subr.mxu0 0.0
    %520 = vmatpush1.msra.mxu0 %v480
    %521 = vmatprep.subr.mxu0 0.0
    %522 = vmatpush1.msra.mxu0 %v481
    %523 = vmatprep.subr.mxu0 0.0
    %524 = vmatpush1.msra.mxu0 %v482
    %525 = vmatprep.subr.mxu0 0.0
    %526 = vmatpush1.msra.mxu0 %v483
    %527 = vmatprep.subr.mxu0 0.0
    %528 = vmatpush1.msra.mxu0 %v484
    %529 = vmatprep.subr.mxu0 0.0
    %530 = vmatpush1.msra.mxu0 %v485
    %531 = vmatprep.subr.mxu0 0.0
    %532 = vmatpush1.msra.mxu0 %v486
    %533 = vmatprep.subr.mxu0 0.0
    %534 = vmatpush1.msra.mxu0 %v487
    %535 = vmatprep.subr.mxu0 0.0
    %536 = vmatpush1.msra.mxu0 %v488
    %537 = vmatprep.subr.mxu0 0.0
    %538 = vmatpush1.msra.mxu0 %v489
    %539 = vmatprep.subr.mxu0 0.0
    %540 = vmatpush1.msra.mxu0 %v490
    %541 = vmatprep.subr.mxu0 0.0
    %542 = vmatpush1.msra.mxu0 %v505
    %543 = vmatprep.subr.mxu0 0.0
    %544 = vmatpush1.msra.mxu0 0.0
    %545 = vmatprep.subr.mxu0 0.0
    %546 = vmatpush1.msra.mxu0 0.0
    %547 = vmatprep.subr.mxu0 0.0
    %548 = vmatpush1.msra.mxu0 0.0
    %549 = vmatprep.subr.mxu0 0.0
    %550 = vmatpush1.msra.mxu0 0.0
    %551 = vmatprep.subr.mxu0 0.0
    %552 = vmatpush1.msra.mxu0 0.0
    %553 = vmatprep.subr.mxu0 0.0
    %554 = vmatpush1.msra.mxu0 0.0
    %555 = vmatprep.subr.mxu0 0.0
    %556 = vmatpush1.msra.mxu0 0.0
    %557 = vmatprep.subr.mxu0 0.0
    %558 = vmatpush1.msra.mxu0 0.0
    %559 = vmatprep.subr.mxu0 0.0
    %560 = vmatpush1.msra.mxu0 0.0
    %561 = vmatprep.subr.mxu0 0.0
    %562 = vmatpush1.msra.mxu0 0.0
    %563 = vmatprep.subr.mxu0 0.0
    %564 = vmatpush1.msra.mxu0 0.0
    %565 = vmatprep.subr.mxu0 0.0
    %566 = vmatpush1.msra.mxu0 0.0
    %567 = vmatprep.subr.mxu0 0.0
    %568 = vmatpush1.msra.mxu0 0.0
    %569 = vmatprep.subr.mxu0 0.0
    %570 = vmatpush1.msra.mxu0 0.0
    %571 = vmatprep.mubr.f32.mxu0 %v501
    %572 = vmatmul.mubr.f32.gmra.mrb[0].mxu0 %v472
    %v573 = vpop.f32.mrb[0].mxu0
    %v574 = vadd.f32 %v497, %v573
    %v575 = vpop.f32.mrb[0].mxu0
    %576 = vdwg.mxu0
    %577 = vst [vmem:[#allocation2] sm:$0xff] %v574
    // Predicated region
    $region38: #{tl_faces_00_forward.1} parent=1 // pred_check
      _
    $region39: #{tl_faces_00_forward.1} parent=1 // pred_check_branch
      %579 = sbr.rel (0) target = $region41
    $region40: #{tl_faces_00_forward.1} parent=1 // pred_region
      %s581 = ssub.s32 128, 128
      %582 = vsyncadd [#allocation3], %s581
      %s584 = sshll.u32 [#allocation2], 4
      %s585 = int_to_ptr.vmem [resolvable:$true] %s584
      %587 = dma.vmem_to_hbm [thread:$0]  %s585, 128, %s9, [#allocation3]
    $region41: #{tl_faces_00_forward.1} parent=1 // pred_fallthru
      _
    // Predicated region
    $region42: #{tl_faces_00_forward.1} parent=1 // pred_check
      _
    $region43: #{tl_faces_00_forward.1} parent=1 // pred_check_branch
      %589 = sbr.rel (0) target = $region45
    $region44: #{tl_faces_00_forward.1} parent=1 // pred_region
      %590 = dma.done [#allocation3], 128
    $region45: #{tl_faces_00_forward.1} parent=1 // pred_fallthru
      _
    %591 = vsyncpa [#allocation3], 1

</llo_original>
